<compile_context>
chip_gen: v7x
topology: tpu7x:2x2x1
jax: 0.10.0
libtpu: 0.0.40
codegen_flags: <defaults>
</compile_context>

<pallas_src>
from functools import partial

import jax
import jax.numpy as jnp
from jax import lax
from jax.experimental import pallas as pl
from jax.experimental.pallas import tpu as pltpu

EPS = 1e-5          # nn.BatchNorm3d default
NEG_SLOPE = 0.01    # nn.LeakyReLU default


def _round_up(x, m):
    return (x + m - 1) // m * m


def _largest_divisor_leq(n, cap):
    for d in range(min(n, cap), 0, -1):
        if n % d == 0:
            return d
    return 1


# ---------- Kernel 1: conv (single im2col NT matmul) + MaxPool3d + BN partial stats ----------
def _conv_pool_stats_kernel(p_ref, w_ref, pooled_ref, stats_ref, *, m_total):
    # p_ref:      (pe, tcols, K)   pe pool-window taps for tcols pooled output positions
    # w_ref:      (Cout, K)
    # pooled_ref: (Cout, tcols)    pooled conv output (channels on sublanes, positions on lanes)
    # stats_ref:  (1, Cout, 2)     per-tile [sum, centered sum-of-squares] BatchNorm partials
    pe, tc, K = p_ref.shape
    cout = w_ref.shape[0]

    # One long NT matmul over all pe taps at once (single MXU stream), f32 accumulation.
    p2 = p_ref[...].reshape(pe * tc, K)           # merge leading dims only -> layout-free
    dn = (((1,), (1,)), ((), ()))                 # contract the K (minor) dims
    acc = lax.dot_general(w_ref[...], p2, dn,
                          preferred_element_type=jnp.float32)      # (Cout, pe*tc)

    # MaxPool3d: elementwise max over the pe taps.  tc % 128 == 0 -> lane-tile-aligned free slices.
    pooled = acc[:, 0:tc]
    for e in range(1, pe):                        # static unroll, 7 maxima on the VPU
        pooled = jnp.maximum(pooled, acc[:, e * tc:(e + 1) * tc])
    pooled_ref[...] = pooled

    # BatchNorm partials: masked (padded columns excluded) and mean-centered per tile so the glue
    # can combine them with Chan's parallel-variance formula (no E[x^2]-mean^2 cancellation).
    start = pl.program_id(0) * tc
    col = lax.broadcasted_iota(jnp.int32, pooled.shape, 1)
    vf = ((col + start) < m_total).astype(jnp.float32)                   # (Cout, tc) validity
    n = jnp.maximum(jnp.sum(vf[0:1, :], axis=1, keepdims=True), 1.0)     # (1, 1)
    s = jnp.sum(pooled * vf, axis=1, keepdims=True)                      # (Cout, 1)
    d = (pooled - s / n) * vf
    ssc = jnp.sum(d * d, axis=1, keepdims=True)                          # (Cout, 1)
    stats_ref[...] = jnp.concatenate([s, ssc], axis=1).reshape(1, cout, 2)


def conv_pool_stats(patches, w_t, *, tcols, m_total):
    pe, m2p, K = patches.shape
    cout = w_t.shape[0]
    grid = m2p // tcols
    return pl.pallas_call(
        partial(_conv_pool_stats_kernel, m_total=m_total),
        out_shape=(jax.ShapeDtypeStruct((cout, m2p), jnp.float32),
                   jax.ShapeDtypeStruct((grid, cout, 2), jnp.float32)),
        grid_spec=pltpu.PrefetchScalarGridSpec(
            num_scalar_prefetch=0,
            grid=(grid,),
            in_specs=[pl.BlockSpec((pe, tcols, K), lambda i: (0, i, 0)),   # K == full dim (108)
                      pl.BlockSpec((cout, K), lambda i: (0, 0))],
            out_specs=(pl.BlockSpec((cout, tcols), lambda i: (0, i)),
                       pl.BlockSpec((1, cout, 2), lambda i: (i, 0, 0))),
        ),
        compiler_params=pltpu.CompilerParams(
            dimension_semantics=("parallel",)),          # both TensorCores on v7x
    )(patches, w_t)


# ---------- Kernel 2: BatchNorm apply + LeakyReLU, lane-dense, tiled & parallel ---------------
def _bn_lrelu_kernel(x_ref, scale_ref, offset_ref, o_ref):
    y = x_ref[...] * scale_ref[...] + offset_ref[...]
    o_ref[...] = jnp.where(y > 0, y, NEG_SLOPE * y)


def bn_lrelu(pooled, scale, offset, *, tcols):
    cout, m2p = pooled.shape
    grid = m2p // tcols
    return pl.pallas_call(
        _bn_lrelu_kernel,
        out_shape=jax.ShapeDtypeStruct((cout, m2p), jnp.float32),
        grid_spec=pltpu.PrefetchScalarGridSpec(
            num_scalar_prefetch=0,
            grid=(grid,),
            in_specs=[pl.BlockSpec((cout, tcols), lambda i: (0, i)),
                      pl.BlockSpec((cout, 1), lambda i: (0, 0)),
                      pl.BlockSpec((cout, 1), lambda i: (0, 0))],
            out_specs=pl.BlockSpec((cout, tcols), lambda i: (0, i)),
        ),
        compiler_params=pltpu.CompilerParams(
            dimension_semantics=("parallel",)),
    )(pooled, scale, offset)


# --------------------------------- ConvLayer forward ------------------------------------------
def conv_layer_forward(x, w, gamma, beta, *, kernel=(3, 1, 1), pooling=(2, 2, 0),
                       drop_rate=0.0, compute_dtype=jnp.bfloat16):
    """x: (N, Cin, D, H, W); w: (Cout, Cin, k, k, k); gamma/beta: (Cout,)."""
    ks, kst, kp = kernel
    pk, pst, pp = pooling
    assert pp == 0 and pk == pst, "pool-window extraction assumes stride == kernel, pad == 0"
    N, Cin, D, H, W = x.shape
    Cout = w.shape[0]

    Do = (D + 2 * kp - ks) // kst + 1
    Ho = (H + 2 * kp - ks) // kst + 1
    Wo = (W + 2 * kp - ks) // kst + 1
    Dp, Hp, Wp = Do // pk, Ho // pk, Wo // pk     # MaxPool3d floor semantics (pad=0)
    M2 = N * Dp * Hp * Wp
    K = Cin * ks ** 3
    pe = pk ** 3

    # ---- cast to the compute dtype FIRST: halves the bytes of every glue pass below -----------
    xc = x.astype(compute_dtype)
    w_t = w.reshape(Cout, K).astype(compute_dtype)

    # ---- im2col glue, ordered so each grid block holds whole pool windows (see TODO above) ----
    xp = jnp.pad(xc, ((0, 0), (0, 0), (kp, kp), (kp, kp), (kp, kp)))
    taps = []
    for kd in range(ks):
        for kh in range(ks):
            for kw_ in range(ks):
                taps.append(xp[:, :, kd:kd + Do * kst:kst,
                               kh:kh + Ho * kst:kst,
                               kw_:kw_ + Wo * kst:kst])
    taps = jnp.stack(taps, axis=2)                          # (N, Cin, k^3, Do, Ho, Wo)
    taps = taps[:, :, :, :Dp * pk, :Hp * pk, :Wp * pk]      # crop partial pool windows (floor)
    taps = taps.reshape(N, Cin, ks ** 3, Dp, pk, Hp, pk, Wp, pk)
    # -> (pk_d, pk_h, pk_w, N, Dp, Hp, Wp, Cin, k^3): pool taps major, K minor
    taps = jnp.transpose(taps, (4, 6, 8, 0, 3, 5, 7, 1, 2))
    patches = taps.reshape(pe, M2, K)                       # K = 108 stays un-padded in HBM

    # ---- tile the pooled-position axis: multiple of 128 lanes, >= 2 tiles when M2 > 128 -------
    if M2 <= 128:
        tcols = 128
    else:
        tcols = min(1024, _round_up(-(-M2 // 2), 128))      # >= 2 tiles for v7x megacore
    M2p = _round_up(M2, tcols)
    if M2p > M2:
        patches = jnp.pad(patches, ((0, 0), (0, M2p - M2), (0, 0)))
    # VMEM budget (v5e's 16 MiB scoped default is the binding one): patch block
    #   pe*tcols*K <= 8*1024*108*2 B ~= 1.7 MiB, ~3.5 MiB double-buffered, + 2 x 32 KiB pooled out.

    # ---- kernel 1: conv matmul + max-pool + BN partials (no full-res conv HBM round trip) -----
    pooled, stats = conv_pool_stats(patches, w_t, tcols=tcols, m_total=M2)

    # ---- tiny glue: Chan parallel-variance combine of per-tile mean-centered partials ---------
    grid1 = M2p // tcols
    counts = jnp.minimum(tcols, M2 - jnp.arange(grid1) * tcols).astype(jnp.float32)   # (grid,)
    sums, sscs = stats[:, :, 0], stats[:, :, 1]             # (grid, Cout)
    mean = jnp.sum(sums, axis=0) / M2                       # (Cout,)
    mean_t = sums / counts[:, None]
    between = jnp.sum(counts[:, None] * (mean_t - mean[None, :]) ** 2, axis=0)
    var = jnp.maximum((jnp.sum(sscs, axis=0) + between) / M2, 0.0)    # biased var (train mode)
    scale = gamma * lax.rsqrt(var + EPS)
    offset = beta - mean * scale

    # ---- kernel 2: BN apply + LeakyReLU over large lane-dense tiles ---------------------------
    n_tiles = M2p // tcols
    cap = max(1, (2 << 20) // (tcols * Cout * 4))           # ~2 MiB f32 per block
    if n_tiles >= 2:
        cap = min(cap, n_tiles // 2)                        # keep >= 2 tiles for v7x megacore
    tc2 = tcols * _largest_divisor_leq(n_tiles, cap)
    out = bn_lrelu(pooled,
                   scale.reshape(Cout, 1).astype(jnp.float32),
                   offset.reshape(Cout, 1).astype(jnp.float32),
                   tcols=tc2)

    # Dropout(drop_rate=0.0) is the identity (see TODO at top for nonzero rates).
    out = out[:, :M2].reshape(Cout, N, Dp, Hp, Wp)
    return jnp.transpose(out, (1, 0, 2, 3, 4))              # back to NCDHW


# --------------------------------- pure-JAX reference -----------------------------------------
def reference_forward(x, w, gamma, beta):
    conv = lax.conv_general_dilated(
        x, w, window_strides=(1, 1, 1), padding=[(1, 1)] * 3,
        dimension_numbers=("NCDHW", "OIDHW", "NCDHW"),
        precision=lax.Precision.HIGHEST)
    pooled = lax.reduce_window(conv, -jnp.inf, lax.max,
                               (1, 1, 2, 2, 2), (1, 1, 2, 2, 2), "VALID")
    mean = jnp.mean(pooled, axis=(0, 2, 3, 4), keepdims=True)
    var = jnp.mean((pooled - mean) ** 2, axis=(0, 2, 3, 4), keepdims=True)
    xhat = (pooled - mean) / jnp.sqrt(var + EPS)
    y = xhat * gamma.reshape(1, -1, 1, 1, 1) + beta.reshape(1, -1, 1, 1, 1)
    return jnp.where(y > 0, y, NEG_SLOPE * y)


if __name__ == "__main__":
    # ConvLayer(in_channels=4, out_channels=8, drop_rate=0.0,
    #           kernel=(3,1,1), pooling=(2,2,0), BN=True, relu_type='leaky')
    N, Cin, Cout, D, H, W = 2, 4, 8, 8, 8, 8
    key = jax.random.PRNGKey(0)
    kx, kw, kg, kb = jax.random.split(key, 4)

    x = jax.random.normal(kx, (N, Cin, D, H, W), dtype=jnp.float32)
    w = jax.random.normal(kw, (Cout, Cin, 3, 3, 3), dtype=jnp.float32) * (2.0 / (Cin * 27)) ** 0.5
    gamma = 1.0 + 0.1 * jax.random.normal(kg, (Cout,), dtype=jnp.float32)
    beta = 0.1 * jax.random.normal(kb, (Cout,), dtype=jnp.float32)

    fwd = jax.jit(conv_layer_forward)
    out = jax.block_until_ready(fwd(x, w, gamma, beta))

    # Reference on bf16-rounded inputs: isolates kernel-math error from the intended bf16 cast
    # (MXU products of bf16 operands are exact and accumulated in f32, so the comparison is tight).
    xr = x.astype(jnp.bfloat16).astype(jnp.float32)
    wr = w.astype(jnp.bfloat16).astype(jnp.float32)
    ref = jax.block_until_ready(reference_forward(xr, wr, gamma, beta))

    assert out.shape == (N, Cout, D // 2, H // 2, W // 2), out.shape
    max_err = float(jnp.max(jnp.abs(out - ref)))
    assert max_err < 2e-3, max_err

    print("KERNEL_OK")
</pallas_src>

<mosaic_0001>
module attributes {stable_mosaic.version = 11 : i64} {
  func.func @_conv_pool_stats_kernel(%arg0: i32, %arg1: memref<8x128x108xbf16, #tpu.memory_space<vmem>>, %arg2: memref<8x108xbf16, #tpu.memory_space<vmem>>, %arg3: memref<8x128xf32, #tpu.memory_space<vmem>>, %arg4: memref<1x8x2xf32, #tpu.memory_space<vmem>>) attributes {dimension_semantics = [#tpu.dimension_semantics<parallel>], iteration_bounds = array<i64: 1>, scalar_prefetch = 0 : i64, scratch_operands = 0 : i64, tpu.core_type = #tpu.core_type<tc>, window_params = [{transform_indices = @transform_0, window_bounds = array<i64: 8, 128, 108>}, {pipeline_mode = #tpu.pipeline_mode<synchronous>, transform_indices = @transform_1, window_bounds = array<i64: 8, 108>}, {transform_indices = @transform_2, window_bounds = array<i64: 8, 128>}, {transform_indices = @transform_3, window_bounds = array<i64: 1, 8, 2>}]} {
    %c0 = arith.constant 0 : index
    %c0_0 = arith.constant 0 : index
    %c0_1 = arith.constant 0 : index
    %0 = vector.load %arg1[%c0, %c0_0, %c0_1] : memref<8x128x108xbf16, #tpu.memory_space<vmem>>, vector<8x128x108xbf16>
    %1 = vector.shape_cast %0 : vector<8x128x108xbf16> to vector<1024x108xbf16>
    %c0_2 = arith.constant 0 : index
    %c0_3 = arith.constant 0 : index
    %2 = vector.load %arg2[%c0_2, %c0_3] : memref<8x108xbf16, #tpu.memory_space<vmem>>, vector<8x108xbf16>
    %cst = arith.constant dense<0.000000e+00> : vector<8x1024xf32>
    %3 = tpu.matmul %2, %1, %cst {dimension_numbers = #tpu.dot_dimension_numbers<[1], [1], [0], [0], [0, 0, 1, 0], [], []>} : vector<8x108xbf16>, vector<1024x108xbf16>, vector<8x1024xf32> -> vector<8x1024xf32>
    %4 = vector.extract_strided_slice %3 {offsets = [0, 0], sizes = [8, 128], strides = [1, 1]} : vector<8x1024xf32> to vector<8x128xf32>
    %5 = vector.extract_strided_slice %3 {offsets = [0, 128], sizes = [8, 128], strides = [1, 1]} : vector<8x1024xf32> to vector<8x128xf32>
    %6 = arith.maximumf %4, %5 : vector<8x128xf32>
    %7 = vector.extract_strided_slice %3 {offsets = [0, 256], sizes = [8, 128], strides = [1, 1]} : vector<8x1024xf32> to vector<8x128xf32>
    %8 = arith.maximumf %6, %7 : vector<8x128xf32>
    %9 = vector.extract_strided_slice %3 {offsets = [0, 384], sizes = [8, 128], strides = [1, 1]} : vector<8x1024xf32> to vector<8x128xf32>
    %10 = arith.maximumf %8, %9 : vector<8x128xf32>
    %11 = vector.extract_strided_slice %3 {offsets = [0, 512], sizes = [8, 128], strides = [1, 1]} : vector<8x1024xf32> to vector<8x128xf32>
    %12 = arith.maximumf %10, %11 : vector<8x128xf32>
    %13 = vector.extract_strided_slice %3 {offsets = [0, 640], sizes = [8, 128], strides = [1, 1]} : vector<8x1024xf32> to vector<8x128xf32>
    %14 = arith.maximumf %12, %13 : vector<8x128xf32>
    %15 = vector.extract_strided_slice %3 {offsets = [0, 768], sizes = [8, 128], strides = [1, 1]} : vector<8x1024xf32> to vector<8x128xf32>
    %16 = arith.maximumf %14, %15 : vector<8x128xf32>
    %17 = vector.extract_strided_slice %3 {offsets = [0, 896], sizes = [8, 128], strides = [1, 1]} : vector<8x1024xf32> to vector<8x128xf32>
    %18 = arith.maximumf %16, %17 : vector<8x128xf32>
    %c0_4 = arith.constant 0 : index
    %c0_5 = arith.constant 0 : index
    %19 = vector.load %arg3[%c0_4, %c0_5] : memref<8x128xf32, #tpu.memory_space<vmem>>, vector<8x128xf32>
    tpu.vector_store %arg3[%c0_4, %c0_5], %18 {strides = array<i32>} : memref<8x128xf32, #tpu.memory_space<vmem>>, vector<8x128xf32>,
    %c128_i32 = arith.constant 128 : i32
    %20 = arith.muli %arg0, %c128_i32 : i32
    %21 = tpu.iota {dimensions = array<i32: 1>} : vector<8x128xi32>
    %22 = vector.broadcast %20 : i32 to vector<8x128xi32>
    %23 = arith.addi %21, %22 : vector<8x128xi32>
    %c128_i32_6 = arith.constant 128 : i32
    %24 = vector.broadcast %c128_i32_6 : i32 to vector<8x128xi32>
    %25 = arith.cmpi slt, %23, %24 : vector<8x128xi32>
    %26 = arith.extui %25 : vector<8x128xi1> to vector<8x128xi32>
    %27 = arith.sitofp %26 : vector<8x128xi32> to vector<8x128xf32>
    %28 = vector.extract_strided_slice %27 {offsets = [0, 0], sizes = [1, 128], strides = [1, 1]} : vector<8x128xf32> to vector<1x128xf32>
    %cst_7 = arith.constant dense<0.000000e+00> : vector<1xf32>
    %29 = vector.multi_reduction <add>, %28, %cst_7 [1] : vector<1x128xf32> to vector<1xf32>
    %30 = vector.shape_cast %29 : vector<1xf32> to vector<1x1xf32>
    %cst_8 = arith.constant 1.000000e+00 : f32
    %31 = vector.broadcast %cst_8 : f32 to vector<1x1xf32>
    %32 = arith.maximumf %30, %31 : vector<1x1xf32>
    %33 = arith.mulf %18, %27 : vector<8x128xf32>
    %cst_9 = arith.constant dense<0.000000e+00> : vector<8xf32>
    %34 = vector.multi_reduction <add>, %33, %cst_9 [1] : vector<8x128xf32> to vector<8xf32>
    %35 = vector.shape_cast %34 : vector<8xf32> to vector<8x1xf32>
    %36 = vector.broadcast %32 : vector<1x1xf32> to vector<8x1xf32>
    %37 = arith.divf %35, %36 : vector<8x1xf32>
    %38 = vector.broadcast %37 : vector<8x1xf32> to vector<8x128xf32>
    %39 = arith.subf %18, %38 : vector<8x128xf32>
    %40 = arith.mulf %39, %27 : vector<8x128xf32>
    %41 = arith.mulf %40, %40 : vector<8x128xf32>
    %cst_10 = arith.constant dense<0.000000e+00> : vector<8xf32>
    %42 = vector.multi_reduction <add>, %41, %cst_10 [1] : vector<8x128xf32> to vector<8xf32>
    %43 = vector.shape_cast %42 : vector<8xf32> to vector<8x1xf32>
    %44 = tpu.concatenate %35, %43 in 1 : vector<8x1xf32>, vector<8x1xf32> -> vector<8x2xf32>
    %45 = vector.shape_cast %44 : vector<8x2xf32> to vector<1x8x2xf32>
    %c0_11 = arith.constant 0 : index
    %c0_12 = arith.constant 0 : index
    %c0_13 = arith.constant 0 : index
    %46 = vector.load %arg4[%c0_11, %c0_12, %c0_13] : memref<1x8x2xf32, #tpu.memory_space<vmem>>, vector<1x8x2xf32>
    tpu.vector_store %arg4[%c0_11, %c0_12, %c0_13], %45 {strides = array<i32>} : memref<1x8x2xf32, #tpu.memory_space<vmem>>, vector<1x8x2xf32>,
    return
  }
  func.func @transform_0(%arg0: i32) -> (i32, i32, i32) {
    %c0_i32 = arith.constant 0 : i32
    %c0_i32_0 = arith.constant 0 : i32
    %c0_i32_1 = arith.constant 0 : i32
    return %c0_i32, %arg0, %c0_i32_0 : i32, i32, i32
  }
  func.func @transform_1(%arg0: i32) -> (i32, i32) {
    %c0_i32 = arith.constant 0 : i32
    %c0_i32_0 = arith.constant 0 : i32
    %c0_i32_1 = arith.constant 0 : i32
    return %c0_i32, %c0_i32_0 : i32, i32
  }
  func.func @transform_2(%arg0: i32) -> (i32, i32) {
    %c0_i32 = arith.constant 0 : i32
    %c0_i32_0 = arith.constant 0 : i32
    return %c0_i32, %arg0 : i32, i32
  }
  func.func @transform_3(%arg0: i32) -> (i32, i32, i32) {
    %c0_i32 = arith.constant 0 : i32
    %c0_i32_0 = arith.constant 0 : i32
    %c0_i32_1 = arith.constant 0 : i32
    return %arg0, %c0_i32, %c0_i32_0 : i32, i32, i32
  }
}

module attributes {stable_mosaic.version = 11 : i64} {
  func.func @_bn_lrelu_kernel(%arg0: i32, %arg1: memref<8x128xf32, #tpu.memory_space<vmem>>, %arg2: memref<8x1xf32, #tpu.memory_space<vmem>>, %arg3: memref<8x1xf32, #tpu.memory_space<vmem>>, %arg4: memref<8x128xf32, #tpu.memory_space<vmem>>) attributes {dimension_semantics = [#tpu.dimension_semantics<parallel>], iteration_bounds = array<i64: 1>, scalar_prefetch = 0 : i64, scratch_operands = 0 : i64, tpu.core_type = #tpu.core_type<tc>, window_params = [{transform_indices = @transform_0, window_bounds = array<i64: 8, 128>}, {pipeline_mode = #tpu.pipeline_mode<synchronous>, transform_indices = @transform_1, window_bounds = array<i64: 8, 1>}, {pipeline_mode = #tpu.pipeline_mode<synchronous>, transform_indices = @transform_2, window_bounds = array<i64: 8, 1>}, {transform_indices = @transform_3, window_bounds = array<i64: 8, 128>}]} {
    %c0 = arith.constant 0 : index
    %c0_0 = arith.constant 0 : index
    %0 = vector.load %arg1[%c0, %c0_0] : memref<8x128xf32, #tpu.memory_space<vmem>>, vector<8x128xf32>
    %c0_1 = arith.constant 0 : index
    %c0_2 = arith.constant 0 : index
    %1 = vector.load %arg2[%c0_1, %c0_2] : memref<8x1xf32, #tpu.memory_space<vmem>>, vector<8x1xf32>
    %2 = vector.broadcast %1 : vector<8x1xf32> to vector<8x128xf32>
    %3 = arith.mulf %0, %2 : vector<8x128xf32>
    %c0_3 = arith.constant 0 : index
    %c0_4 = arith.constant 0 : index
    %4 = vector.load %arg3[%c0_3, %c0_4] : memref<8x1xf32, #tpu.memory_space<vmem>>, vector<8x1xf32>
    %5 = vector.broadcast %4 : vector<8x1xf32> to vector<8x128xf32>
    %6 = arith.addf %3, %5 : vector<8x128xf32>
    %cst = arith.constant 0.000000e+00 : f32
    %7 = vector.broadcast %cst : f32 to vector<8x128xf32>
    %8 = arith.cmpf ogt, %6, %7 : vector<8x128xf32>
    %cst_5 = arith.constant 0.00999999977 : f32
    %9 = vector.broadcast %cst_5 : f32 to vector<8x128xf32>
    %10 = arith.mulf %9, %6 : vector<8x128xf32>
    %11 = arith.select %8, %6, %10 : vector<8x128xi1>, vector<8x128xf32>
    %c0_6 = arith.constant 0 : index
    %c0_7 = arith.constant 0 : index
    %12 = vector.load %arg4[%c0_6, %c0_7] : memref<8x128xf32, #tpu.memory_space<vmem>>, vector<8x128xf32>
    tpu.vector_store %arg4[%c0_6, %c0_7], %11 {strides = array<i32>} : memref<8x128xf32, #tpu.memory_space<vmem>>, vector<8x128xf32>,
    return
  }
  func.func @transform_0(%arg0: i32) -> (i32, i32) {
    %c0_i32 = arith.constant 0 : i32
    %c0_i32_0 = arith.constant 0 : i32
    return %c0_i32, %arg0 : i32, i32
  }
  func.func @transform_1(%arg0: i32) -> (i32, i32) {
    %c0_i32 = arith.constant 0 : i32
    %c0_i32_0 = arith.constant 0 : i32
    %c0_i32_1 = arith.constant 0 : i32
    return %c0_i32, %c0_i32_0 : i32, i32
  }
  func.func @transform_2(%arg0: i32) -> (i32, i32) {
    %c0_i32 = arith.constant 0 : i32
    %c0_i32_0 = arith.constant 0 : i32
    %c0_i32_1 = arith.constant 0 : i32
    return %c0_i32, %c0_i32_0 : i32, i32
  }
  func.func @transform_3(%arg0: i32) -> (i32, i32) {
    %c0_i32 = arith.constant 0 : i32
    %c0_i32_0 = arith.constant 0 : i32
    return %c0_i32, %arg0 : i32, i32
  }
}

</mosaic_0001>

<llo_original>
// kernel: conv_layer_forward.2
$region0: #{conv_layer_forward.2}
  #allocation0 [shape = 'u32[]', space=smem, size = 0x4, offset = 0x4, fixed_abs, tag = 'smem constant byte address 0x4 - core index']
  #allocation1 [shape = 'u32[144,128]{1,0:T(1,128)}', space=vmem, size = 0x12000, scoped, tag = 'internal scratch']
  %s0 = inlined_call_operand.vmem [shape: bf16[8,128,108], index: 0, kind: input, shape index: {}]
  %s1 = inlined_call_operand.vmem [shape: bf16[8,108], index: 1, kind: input, shape index: {}]
  %s2 = inlined_call_operand.vmem [shape: f32[8,128], index: 2, kind: output, shape index: {0}]
  %s3 = inlined_call_operand.vmem [shape: f32[1,8,2], index: 3, kind: output, shape index: {1}]
  %4 = xla_tuple %s2, %s3
  %s5 = sld [smem:[#allocation0]]
  $region26: #{conv_layer_forward.2} parent=0
    _
  %s7 = ssub.s32 1, %s5
  %s8 = scalar_select 0, %s7, %s5
  // Predicated region
  $region2: #{conv_layer_forward.2} parent=0 // pred_check
    _
  $region3: #{conv_layer_forward.2} parent=0 // pred_check_branch
    %10 = sbr.rel (0) target = $region5
  $region4: #{conv_layer_forward.2} parent=0 // pred_region
    _
  $region5: #{conv_layer_forward.2} parent=0 // pred_fallthru
    _
  // Predicated region
  $region6: #{conv_layer_forward.2} parent=0 // pred_check
    _
  $region7: #{conv_layer_forward.2} parent=0 // pred_check_branch
    %12 = sbr.rel (0) target = $region9
  $region8: #{conv_layer_forward.2} parent=0 // pred_region
    _
  $region9: #{conv_layer_forward.2} parent=0 // pred_fallthru
    _
  %v14 = vld [vmem:[%s0] sm:$0xf]
  %v15 = vld [vmem:[%s0 + $0x4] sm:$0xf]
  %v16 = vld [vmem:[%s0 + $0x8] sm:$0xf]
  %v17 = vld [vmem:[%s0 + $0xc] sm:$0xf]
  %v18 = vld [vmem:[%s0 + $0x10] sm:$0xf]
  %v19 = vld [vmem:[%s0 + $0x14] sm:$0xf]
  %v20 = vld [vmem:[%s0 + $0x18] sm:$0xf]
  %v21 = vld [vmem:[%s0 + $0x1c] sm:$0xf]
  %v22 = vld [vmem:[%s0 + $0x20] sm:$0xf]
  %v23 = vld [vmem:[%s0 + $0x24] sm:$0xf]
  %v24 = vld [vmem:[%s0 + $0x28] sm:$0xf]
  %v25 = vld [vmem:[%s0 + $0x2c] sm:$0xf]
  %v26 = vld [vmem:[%s0 + $0x30] sm:$0xf]
  %v27 = vld [vmem:[%s0 + $0x34] sm:$0xf]
  %v28 = vld [vmem:[%s0 + $0x38] sm:$0xf]
  %v29 = vld [vmem:[%s0 + $0x3c] sm:$0xf]
  %v30 = vld [vmem:[%s0 + $0x40] sm:$0xf]
  %v31 = vld [vmem:[%s0 + $0x44] sm:$0xf]
  %v32 = vld [vmem:[%s0 + $0x48] sm:$0xf]
  %v33 = vld [vmem:[%s0 + $0x4c] sm:$0xf]
  %v34 = vld [vmem:[%s0 + $0x50] sm:$0xf]
  %v35 = vld [vmem:[%s0 + $0x54] sm:$0xf]
  %v36 = vld [vmem:[%s0 + $0x58] sm:$0xf]
  %v37 = vld [vmem:[%s0 + $0x5c] sm:$0xf]
  %v38 = vld [vmem:[%s0 + $0x60] sm:$0xf]
  %v39 = vld [vmem:[%s0 + $0x64] sm:$0xf]
  %v40 = vld [vmem:[%s0 + $0x68] sm:$0xf]
  %v41 = vld [vmem:[%s0 + $0x6c] sm:$0xf]
  %v42 = vld [vmem:[%s0 + $0x70] sm:$0xf]
  %v43 = vld [vmem:[%s0 + $0x74] sm:$0xf]
  %v44 = vld [vmem:[%s0 + $0x78] sm:$0xf]
  %v45 = vld [vmem:[%s0 + $0x7c] sm:$0xf]
  %v46 = vld [vmem:[%s0 + $0x80] sm:$0xf]
  %v47 = vld [vmem:[%s0 + $0x84] sm:$0xf]
  %v48 = vld [vmem:[%s0 + $0x88] sm:$0xf]
  %v49 = vld [vmem:[%s0 + $0x8c] sm:$0xf]
  %v50 = vld [vmem:[%s0 + $0x90] sm:$0xf]
  %v51 = vld [vmem:[%s0 + $0x94] sm:$0xf]
  %v52 = vld [vmem:[%s0 + $0x98] sm:$0xf]
  %v53 = vld [vmem:[%s0 + $0x9c] sm:$0xf]
  %v54 = vld [vmem:[%s0 + $0xa0] sm:$0xf]
  %v55 = vld [vmem:[%s0 + $0xa4] sm:$0xf]
  %v56 = vld [vmem:[%s0 + $0xa8] sm:$0xf]
  %v57 = vld [vmem:[%s0 + $0xac] sm:$0xf]
  %v58 = vld [vmem:[%s0 + $0xb0] sm:$0xf]
  %v59 = vld [vmem:[%s0 + $0xb4] sm:$0xf]
  %v60 = vld [vmem:[%s0 + $0xb8] sm:$0xf]
  %v61 = vld [vmem:[%s0 + $0xbc] sm:$0xf]
  %v62 = vld [vmem:[%s0 + $0xc0] sm:$0xf]
  %v63 = vld [vmem:[%s0 + $0xc4] sm:$0xf]
  %v64 = vld [vmem:[%s0 + $0xc8] sm:$0xf]
  %v65 = vld [vmem:[%s0 + $0xcc] sm:$0xf]
  %v66 = vld [vmem:[%s0 + $0xd0] sm:$0xf]
  %v67 = vld [vmem:[%s0 + $0xd4] sm:$0xf]
  %v68 = vld [vmem:[%s0 + $0xd8] sm:$0xf]
  %v69 = vld [vmem:[%s0 + $0xdc] sm:$0xf]
  %v70 = vld [vmem:[%s0 + $0xe0] sm:$0xf]
  %v71 = vld [vmem:[%s0 + $0xe4] sm:$0xf]
  %v72 = vld [vmem:[%s0 + $0xe8] sm:$0xf]
  %v73 = vld [vmem:[%s0 + $0xec] sm:$0xf]
  %v74 = vld [vmem:[%s0 + $0xf0] sm:$0xf]
  %v75 = vld [vmem:[%s0 + $0xf4] sm:$0xf]
  %v76 = vld [vmem:[%s0 + $0xf8] sm:$0xf]
  %v77 = vld [vmem:[%s0 + $0xfc] sm:$0xf]
  %v78 = vld [vmem:[%s0 + $0x100] sm:$0xf]
  %v79 = vld [vmem:[%s0 + $0x104] sm:$0xf]
  %v80 = vld [vmem:[%s0 + $0x108] sm:$0xf]
  %v81 = vld [vmem:[%s0 + $0x10c] sm:$0xf]
  %v82 = vld [vmem:[%s0 + $0x110] sm:$0xf]
  %v83 = vld [vmem:[%s0 + $0x114] sm:$0xf]
  %v84 = vld [vmem:[%s0 + $0x118] sm:$0xf]
  %v85 = vld [vmem:[%s0 + $0x11c] sm:$0xf]
  %v86 = vld [vmem:[%s0 + $0x120] sm:$0xf]
  %v87 = vld [vmem:[%s0 + $0x124] sm:$0xf]
  %v88 = vld [vmem:[%s0 + $0x128] sm:$0xf]
  %v89 = vld [vmem:[%s0 + $0x12c] sm:$0xf]
  %v90 = vld [vmem:[%s0 + $0x130] sm:$0xf]
  %v91 = vld [vmem:[%s0 + $0x134] sm:$0xf]
  %v92 = vld [vmem:[%s0 + $0x138] sm:$0xf]
  %v93 = vld [vmem:[%s0 + $0x13c] sm:$0xf]
  %v94 = vld [vmem:[%s0 + $0x140] sm:$0xf]
  %v95 = vld [vmem:[%s0 + $0x144] sm:$0xf]
  %v96 = vld [vmem:[%s0 + $0x148] sm:$0xf]
  %v97 = vld [vmem:[%s0 + $0x14c] sm:$0xf]
  %v98 = vld [vmem:[%s0 + $0x150] sm:$0xf]
  %v99 = vld [vmem:[%s0 + $0x154] sm:$0xf]
  %v100 = vld [vmem:[%s0 + $0x158] sm:$0xf]
  %v101 = vld [vmem:[%s0 + $0x15c] sm:$0xf]
  %v102 = vld [vmem:[%s0 + $0x160] sm:$0xf]
  %v103 = vld [vmem:[%s0 + $0x164] sm:$0xf]
  %v104 = vld [vmem:[%s0 + $0x168] sm:$0xf]
  %v105 = vld [vmem:[%s0 + $0x16c] sm:$0xf]
  %v106 = vld [vmem:[%s0 + $0x170] sm:$0xf]
  %v107 = vld [vmem:[%s0 + $0x174] sm:$0xf]
  %v108 = vld [vmem:[%s0 + $0x178] sm:$0xf]
  %v109 = vld [vmem:[%s0 + $0x17c] sm:$0xf]
  %v110 = vld [vmem:[%s0 + $0x180] sm:$0xf]
  %v111 = vld [vmem:[%s0 + $0x184] sm:$0xf]
  %v112 = vld [vmem:[%s0 + $0x188] sm:$0xf]
  %v113 = vld [vmem:[%s0 + $0x18c] sm:$0xf]
  %v114 = vld [vmem:[%s0 + $0x190] sm:$0xf]
  %v115 = vld [vmem:[%s0 + $0x194] sm:$0xf]
  %v116 = vld [vmem:[%s0 + $0x198] sm:$0xf]
  %v117 = vld [vmem:[%s0 + $0x19c] sm:$0xf]
  %v118 = vld [vmem:[%s0 + $0x1a0] sm:$0xf]
  %v119 = vld [vmem:[%s0 + $0x1a4] sm:$0xf]
  %v120 = vld [vmem:[%s0 + $0x1a8] sm:$0xf]
  %v121 = vld [vmem:[%s0 + $0x1ac] sm:$0xf]
  %v122 = vld [vmem:[%s0 + $0x1b0] sm:$0xf]
  %v123 = vld [vmem:[%s0 + $0x1b4] sm:$0xf]
  %v124 = vld [vmem:[%s0 + $0x1b8] sm:$0xf]
  %v125 = vld [vmem:[%s0 + $0x1bc] sm:$0xf]
  %v126 = vld [vmem:[%s0 + $0x1c0] sm:$0xf]
  %v127 = vld [vmem:[%s0 + $0x1c4] sm:$0xf]
  %v128 = vld [vmem:[%s0 + $0x1c8] sm:$0xf]
  %v129 = vld [vmem:[%s0 + $0x1cc] sm:$0xf]
  %v130 = vld [vmem:[%s0 + $0x1d0] sm:$0xf]
  %v131 = vld [vmem:[%s0 + $0x1d4] sm:$0xf]
  %v132 = vld [vmem:[%s0 + $0x1d8] sm:$0xf]
  %v133 = vld [vmem:[%s0 + $0x1dc] sm:$0xf]
  %v134 = vld [vmem:[%s0 + $0x1e0] sm:$0xf]
  %v135 = vld [vmem:[%s0 + $0x1e4] sm:$0xf]
  %v136 = vld [vmem:[%s0 + $0x1e8] sm:$0xf]
  %v137 = vld [vmem:[%s0 + $0x1ec] sm:$0xf]
  %v138 = vld [vmem:[%s0 + $0x1f0] sm:$0xf]
  %v139 = vld [vmem:[%s0 + $0x1f4] sm:$0xf]
  %v140 = vld [vmem:[%s0 + $0x1f8] sm:$0xf]
  %v141 = vld [vmem:[%s0 + $0x1fc] sm:$0xf]
  %v142 = vld [vmem:[%s1] sm:$0xf]
  %v271 = vunpack.c.l.b16 %v14
  %v272 = vunpack.c.l.b16 %v15
  %v273 = vunpack.c.l.b16 %v16
  %v274 = vunpack.c.l.b16 %v17
  %v275 = vunpack.c.l.b16 %v18
  %v276 = vunpack.c.l.b16 %v19
  %v277 = vunpack.c.l.b16 %v20
  %v278 = vunpack.c.l.b16 %v21
  %v279 = vunpack.c.l.b16 %v22
  %v280 = vunpack.c.l.b16 %v23
  %v281 = vunpack.c.l.b16 %v24
  %v282 = vunpack.c.l.b16 %v25
  %v283 = vunpack.c.l.b16 %v26
  %v284 = vunpack.c.l.b16 %v27
  %v285 = vunpack.c.l.b16 %v28
  %v286 = vunpack.c.l.b16 %v29
  %v287 = vunpack.c.l.b16 %v30
  %v288 = vunpack.c.l.b16 %v31
  %v289 = vunpack.c.l.b16 %v32
  %v290 = vunpack.c.l.b16 %v33
  %v291 = vunpack.c.l.b16 %v34
  %v292 = vunpack.c.l.b16 %v35
  %v293 = vunpack.c.l.b16 %v36
  %v294 = vunpack.c.l.b16 %v37
  %v295 = vunpack.c.l.b16 %v38
  %v296 = vunpack.c.l.b16 %v39
  %v297 = vunpack.c.l.b16 %v40
  %v298 = vunpack.c.l.b16 %v41
  %v299 = vunpack.c.l.b16 %v42
  %v300 = vunpack.c.l.b16 %v43
  %v301 = vunpack.c.l.b16 %v44
  %v302 = vunpack.c.l.b16 %v45
  %v303 = vunpack.c.l.b16 %v46
  %v304 = vunpack.c.l.b16 %v47
  %v305 = vunpack.c.l.b16 %v48
  %v306 = vunpack.c.l.b16 %v49
  %v307 = vunpack.c.l.b16 %v50
  %v308 = vunpack.c.l.b16 %v51
  %v309 = vunpack.c.l.b16 %v52
  %v310 = vunpack.c.l.b16 %v53
  %v311 = vunpack.c.l.b16 %v54
  %v312 = vunpack.c.l.b16 %v55
  %v313 = vunpack.c.l.b16 %v56
  %v314 = vunpack.c.l.b16 %v57
  %v315 = vunpack.c.l.b16 %v58
  %v316 = vunpack.c.l.b16 %v59
  %v317 = vunpack.c.l.b16 %v60
  %v318 = vunpack.c.l.b16 %v61
  %v319 = vunpack.c.l.b16 %v62
  %v320 = vunpack.c.l.b16 %v63
  %v321 = vunpack.c.l.b16 %v64
  %v322 = vunpack.c.l.b16 %v65
  %v323 = vunpack.c.l.b16 %v66
  %v324 = vunpack.c.l.b16 %v67
  %v325 = vunpack.c.l.b16 %v68
  %v326 = vunpack.c.l.b16 %v69
  %v327 = vunpack.c.l.b16 %v70
  %v328 = vunpack.c.l.b16 %v71
  %v329 = vunpack.c.l.b16 %v72
  %v330 = vunpack.c.l.b16 %v73
  %v331 = vunpack.c.l.b16 %v74
  %v332 = vunpack.c.l.b16 %v75
  %v333 = vunpack.c.l.b16 %v76
  %v334 = vunpack.c.l.b16 %v77
  %v335 = vunpack.c.l.b16 %v78
  %v336 = vunpack.c.l.b16 %v79
  %v337 = vunpack.c.l.b16 %v80
  %v338 = vunpack.c.l.b16 %v81
  %v339 = vunpack.c.l.b16 %v82
  %v340 = vunpack.c.l.b16 %v83
  %v341 = vunpack.c.l.b16 %v84
  %v342 = vunpack.c.l.b16 %v85
  %v343 = vunpack.c.l.b16 %v86
  %v344 = vunpack.c.l.b16 %v87
  %v345 = vunpack.c.l.b16 %v88
  %v346 = vunpack.c.l.b16 %v89
  %v347 = vunpack.c.l.b16 %v90
  %v348 = vunpack.c.l.b16 %v91
  %v349 = vunpack.c.l.b16 %v92
  %v350 = vunpack.c.l.b16 %v93
  %v351 = vunpack.c.l.b16 %v94
  %v352 = vunpack.c.l.b16 %v95
  %v353 = vunpack.c.l.b16 %v96
  %v354 = vunpack.c.l.b16 %v97
  %v355 = vunpack.c.l.b16 %v98
  %v356 = vunpack.c.l.b16 %v99
  %v357 = vunpack.c.l.b16 %v100
  %v358 = vunpack.c.l.b16 %v101
  %v359 = vunpack.c.l.b16 %v102
  %v360 = vunpack.c.l.b16 %v103
  %v361 = vunpack.c.l.b16 %v104
  %v362 = vunpack.c.l.b16 %v105
  %v363 = vunpack.c.l.b16 %v106
  %v364 = vunpack.c.l.b16 %v107
  %v365 = vunpack.c.l.b16 %v108
  %v366 = vunpack.c.l.b16 %v109
  %v367 = vunpack.c.l.b16 %v110
  %v368 = vunpack.c.l.b16 %v111
  %v369 = vunpack.c.l.b16 %v112
  %v370 = vunpack.c.l.b16 %v113
  %v371 = vunpack.c.l.b16 %v114
  %v372 = vunpack.c.l.b16 %v115
  %v373 = vunpack.c.l.b16 %v116
  %v374 = vunpack.c.l.b16 %v117
  %v375 = vunpack.c.l.b16 %v118
  %v376 = vunpack.c.l.b16 %v119
  %v377 = vunpack.c.l.b16 %v120
  %v378 = vunpack.c.l.b16 %v121
  %v379 = vunpack.c.l.b16 %v122
  %v380 = vunpack.c.l.b16 %v123
  %v381 = vunpack.c.l.b16 %v124
  %v382 = vunpack.c.l.b16 %v125
  %v383 = vunpack.c.l.b16 %v126
  %v384 = vunpack.c.l.b16 %v127
  %v385 = vunpack.c.l.b16 %v128
  %v386 = vunpack.c.l.b16 %v129
  %v387 = vunpack.c.l.b16 %v130
  %v388 = vunpack.c.l.b16 %v131
  %v389 = vunpack.c.l.b16 %v132
  %v390 = vunpack.c.l.b16 %v133
  %v391 = vunpack.c.l.b16 %v134
  %v392 = vunpack.c.l.b16 %v135
  %v393 = vunpack.c.l.b16 %v136
  %v394 = vunpack.c.l.b16 %v137
  %v395 = vunpack.c.l.b16 %v138
  %v396 = vunpack.c.l.b16 %v139
  %v397 = vunpack.c.l.b16 %v140
  %v398 = vunpack.c.l.b16 %v141
  %v399 = vpack.c.b16 %v272, %v271
  %v400 = vpack.c.b16 %v274, %v273
  %v401 = vpack.c.b16 %v276, %v275
  %v402 = vpack.c.b16 %v278, %v277
  %v403 = vpack.c.b16 %v280, %v279
  %v404 = vpack.c.b16 %v282, %v281
  %v405 = vpack.c.b16 %v284, %v283
  %v406 = vpack.c.b16 %v286, %v285
  %v407 = vpack.c.b16 %v288, %v287
  %v408 = vpack.c.b16 %v290, %v289
  %v409 = vpack.c.b16 %v292, %v291
  %v410 = vpack.c.b16 %v294, %v293
  %v411 = vpack.c.b16 %v296, %v295
  %v412 = vpack.c.b16 %v298, %v297
  %v413 = vpack.c.b16 %v300, %v299
  %v414 = vpack.c.b16 %v302, %v301
  %v415 = vpack.c.b16 %v304, %v303
  %v416 = vpack.c.b16 %v306, %v305
  %v417 = vpack.c.b16 %v308, %v307
  %v418 = vpack.c.b16 %v310, %v309
  %v419 = vpack.c.b16 %v312, %v311
  %v420 = vpack.c.b16 %v314, %v313
  %v421 = vpack.c.b16 %v316, %v315
  %v422 = vpack.c.b16 %v318, %v317
  %v423 = vpack.c.b16 %v320, %v319
  %v424 = vpack.c.b16 %v322, %v321
  %v425 = vpack.c.b16 %v324, %v323
  %v426 = vpack.c.b16 %v326, %v325
  %v427 = vpack.c.b16 %v328, %v327
  %v428 = vpack.c.b16 %v330, %v329
  %v429 = vpack.c.b16 %v332, %v331
  %v430 = vpack.c.b16 %v334, %v333
  %v431 = vpack.c.b16 %v336, %v335
  %v432 = vpack.c.b16 %v338, %v337
  %v433 = vpack.c.b16 %v340, %v339
  %v434 = vpack.c.b16 %v342, %v341
  %v435 = vpack.c.b16 %v344, %v343
  %v436 = vpack.c.b16 %v346, %v345
  %v437 = vpack.c.b16 %v348, %v347
  %v438 = vpack.c.b16 %v350, %v349
  %v439 = vpack.c.b16 %v352, %v351
  %v440 = vpack.c.b16 %v354, %v353
  %v441 = vpack.c.b16 %v356, %v355
  %v442 = vpack.c.b16 %v358, %v357
  %v443 = vpack.c.b16 %v360, %v359
  %v444 = vpack.c.b16 %v362, %v361
  %v445 = vpack.c.b16 %v364, %v363
  %v446 = vpack.c.b16 %v366, %v365
  %v447 = vpack.c.b16 %v368, %v367
  %v448 = vpack.c.b16 %v370, %v369
  %v449 = vpack.c.b16 %v372, %v371
  %v450 = vpack.c.b16 %v374, %v373
  %v451 = vpack.c.b16 %v376, %v375
  %v452 = vpack.c.b16 %v378, %v377
  %v453 = vpack.c.b16 %v380, %v379
  %v454 = vpack.c.b16 %v382, %v381
  %v455 = vpack.c.b16 %v384, %v383
  %v456 = vpack.c.b16 %v386, %v385
  %v457 = vpack.c.b16 %v388, %v387
  %v458 = vpack.c.b16 %v390, %v389
  %v459 = vpack.c.b16 %v392, %v391
  %v460 = vpack.c.b16 %v394, %v393
  %v461 = vpack.c.b16 %v396, %v395
  %v462 = vpack.c.b16 %v398, %v397
  %vm463 = vcmask 883712
  %v465 = vsel %vm463, %v142, 0
  %v468 = vsel %vm463, %v399, 0
  %v471 = vsel %vm463, %v400, 0
  %v474 = vsel %vm463, %v401, 0
  %v477 = vsel %vm463, %v402, 0
  %v480 = vsel %vm463, %v403, 0
  %v483 = vsel %vm463, %v404, 0
  %v486 = vsel %vm463, %v405, 0
  %v489 = vsel %vm463, %v406, 0
  %v492 = vsel %vm463, %v407, 0
  %v495 = vsel %vm463, %v408, 0
  %v498 = vsel %vm463, %v409, 0
  %v501 = vsel %vm463, %v410, 0
  %v504 = vsel %vm463, %v411, 0
  %v507 = vsel %vm463, %v412, 0
  %v510 = vsel %vm463, %v413, 0
  %v513 = vsel %vm463, %v414, 0
  %v516 = vsel %vm463, %v415, 0
  %v519 = vsel %vm463, %v416, 0
  %v522 = vsel %vm463, %v417, 0
  %v525 = vsel %vm463, %v418, 0
  %v528 = vsel %vm463, %v419, 0
  %v531 = vsel %vm463, %v420, 0
  %v534 = vsel %vm463, %v421, 0
  %v537 = vsel %vm463, %v422, 0
  %v540 = vsel %vm463, %v423, 0
  %v543 = vsel %vm463, %v424, 0
  %v546 = vsel %vm463, %v425, 0
  %v549 = vsel %vm463, %v426, 0
  %v552 = vsel %vm463, %v427, 0
  %v555 = vsel %vm463, %v428, 0
  %v558 = vsel %vm463, %v429, 0
  %v561 = vsel %vm463, %v430, 0
  %v564 = vsel %vm463, %v431, 0
  %v567 = vsel %vm463, %v432, 0
  %v570 = vsel %vm463, %v433, 0
  %v573 = vsel %vm463, %v434, 0
  %v576 = vsel %vm463, %v435, 0
  %v579 = vsel %vm463, %v436, 0
  %v582 = vsel %vm463, %v437, 0
  %v585 = vsel %vm463, %v438, 0
  %v588 = vsel %vm463, %v439, 0
  %v591 = vsel %vm463, %v440, 0
  %v594 = vsel %vm463, %v441, 0
  %v597 = vsel %vm463, %v442, 0
  %v600 = vsel %vm463, %v443, 0
  %v603 = vsel %vm463, %v444, 0
  %v606 = vsel %vm463, %v445, 0
  %v609 = vsel %vm463, %v446, 0
  %v612 = vsel %vm463, %v447, 0
  %v615 = vsel %vm463, %v448, 0
  %v618 = vsel %vm463, %v449, 0
  %v621 = vsel %vm463, %v450, 0
  %v624 = vsel %vm463, %v451, 0
  %v627 = vsel %vm463, %v452, 0
  %v630 = vsel %vm463, %v453, 0
  %v633 = vsel %vm463, %v454, 0
  %v636 = vsel %vm463, %v455, 0
  %v639 = vsel %vm463, %v456, 0
  %v642 = vsel %vm463, %v457, 0
  %v645 = vsel %vm463, %v458, 0
  %v648 = vsel %vm463, %v459, 0
  %v651 = vsel %vm463, %v460, 0
  %v654 = vsel %vm463, %v461, 0
  %v657 = vsel %vm463, %v462, 0
  %659 = vmatprep.subr.bf16.mxu0 0
  %660 = vmatpush1.bf16.xpose.msra.mxu0 %v468
  %661 = vmatprep.subr.bf16.mxu0 0
  %662 = vmatpush1.bf16.xpose.msra.mxu0 %v471
  %663 = vmatprep.subr.bf16.mxu0 0
  %664 = vmatpush1.bf16.xpose.msra.mxu0 %v474
  %665 = vmatprep.subr.bf16.mxu0 0
  %666 = vmatpush1.bf16.xpose.msra.mxu0 %v477
  %667 = vmatprep.subr.bf16.mxu0 0
  %668 = vmatpush1.bf16.xpose.msra.mxu0 %v480
  %669 = vmatprep.subr.bf16.mxu0 0
  %670 = vmatpush1.bf16.xpose.msra.mxu0 %v483
  %671 = vmatprep.subr.bf16.mxu0 0
  %672 = vmatpush1.bf16.xpose.msra.mxu0 %v486
  %673 = vmatprep.subr.bf16.mxu0 0
  %674 = vmatpush1.bf16.xpose.msra.mxu0 %v489
  %675 = vmatprep.subr.bf16.mxu0 0
  %676 = vmatpush1.bf16.xpose.msra.mxu0 %v492
  %677 = vmatprep.subr.bf16.mxu0 0
  %678 = vmatpush1.bf16.xpose.msra.mxu0 %v495
  %679 = vmatprep.subr.bf16.mxu0 0
  %680 = vmatpush1.bf16.xpose.msra.mxu0 %v498
  %681 = vmatprep.subr.bf16.mxu0 0
  %682 = vmatpush1.bf16.xpose.msra.mxu0 %v501
  %683 = vmatprep.subr.bf16.mxu0 0
  %684 = vmatpush1.bf16.xpose.msra.mxu0 %v504
  %685 = vmatprep.subr.bf16.mxu0 0
  %686 = vmatpush1.bf16.xpose.msra.mxu0 %v507
  %687 = vmatprep.subr.bf16.mxu0 0
  %688 = vmatpush1.bf16.xpose.msra.mxu0 %v510
  %689 = vmatprep.subr.bf16.mxu0 0
  %690 = vmatpush1.bf16.xpose.msra.mxu0 %v513
  %691 = vmatprep.mubr.bf16.mxu0 0
  %692 = vmatmul.mubr.bf16.gmra.mrb[0].mxu0 %v465
  %v693 = vpop.f32.mrb[0].mxu0
  %v694 = vadd.f32 0.0, %v693
  %v695 = vpop.f32.mrb[0].mxu0
  %v696 = vadd.f32 0.0, %v695
  %v697 = vpop.f32.mrb[0].mxu0
  %v698 = vpop.f32.mrb[0].mxu0
  %699 = vdwg.mxu0
  %700 = vmatprep.subr.bf16.mxu0 0
  %701 = vmatpush1.bf16.xpose.msra.mxu0 %v516
  %702 = vmatprep.subr.bf16.mxu0 0
  %703 = vmatpush1.bf16.xpose.msra.mxu0 %v519
  %704 = vmatprep.subr.bf16.mxu0 0
  %705 = vmatpush1.bf16.xpose.msra.mxu0 %v522
  %706 = vmatprep.subr.bf16.mxu0 0
  %707 = vmatpush1.bf16.xpose.msra.mxu0 %v525
  %708 = vmatprep.subr.bf16.mxu0 0
  %709 = vmatpush1.bf16.xpose.msra.mxu0 %v528
  %710 = vmatprep.subr.bf16.mxu0 0
  %711 = vmatpush1.bf16.xpose.msra.mxu0 %v531
  %712 = vmatprep.subr.bf16.mxu0 0
  %713 = vmatpush1.bf16.xpose.msra.mxu0 %v534
  %714 = vmatprep.subr.bf16.mxu0 0
  %715 = vmatpush1.bf16.xpose.msra.mxu0 %v537
  %716 = vmatprep.subr.bf16.mxu0 0
  %717 = vmatpush1.bf16.xpose.msra.mxu0 %v540
  %718 = vmatprep.subr.bf16.mxu0 0
  %719 = vmatpush1.bf16.xpose.msra.mxu0 %v543
  %720 = vmatprep.subr.bf16.mxu0 0
  %721 = vmatpush1.bf16.xpose.msra.mxu0 %v546
  %722 = vmatprep.subr.bf16.mxu0 0
  %723 = vmatpush1.bf16.xpose.msra.mxu0 %v549
  %724 = vmatprep.subr.bf16.mxu0 0
  %725 = vmatpush1.bf16.xpose.msra.mxu0 %v552
  %726 = vmatprep.subr.bf16.mxu0 0
  %727 = vmatpush1.bf16.xpose.msra.mxu0 %v555
  %728 = vmatprep.subr.bf16.mxu0 0
  %729 = vmatpush1.bf16.xpose.msra.mxu0 %v558
  %730 = vmatprep.subr.bf16.mxu0 0
  %731 = vmatpush1.bf16.xpose.msra.mxu0 %v561
  %732 = vmatprep.mubr.bf16.mxu0 0
  %733 = vmatmul.mubr.bf16.gmra.mrb[0].mxu0 %v465
  %v734 = vpop.f32.mrb[0].mxu0
  %v735 = vadd.f32 0.0, %v734
  %v736 = vpop.f32.mrb[0].mxu0
  %v737 = vadd.f32 0.0, %v736
  %v738 = vpop.f32.mrb[0].mxu0
  %v739 = vpop.f32.mrb[0].mxu0
  %740 = vdwg.mxu0
  %741 = vmatprep.subr.bf16.mxu0 0
  %742 = vmatpush1.bf16.xpose.msra.mxu0 %v564
  %743 = vmatprep.subr.bf16.mxu0 0
  %744 = vmatpush1.bf16.xpose.msra.mxu0 %v567
  %745 = vmatprep.subr.bf16.mxu0 0
  %746 = vmatpush1.bf16.xpose.msra.mxu0 %v570
  %747 = vmatprep.subr.bf16.mxu0 0
  %748 = vmatpush1.bf16.xpose.msra.mxu0 %v573
  %749 = vmatprep.subr.bf16.mxu0 0
  %750 = vmatpush1.bf16.xpose.msra.mxu0 %v576
  %751 = vmatprep.subr.bf16.mxu0 0
  %752 = vmatpush1.bf16.xpose.msra.mxu0 %v579
  %753 = vmatprep.subr.bf16.mxu0 0
  %754 = vmatpush1.bf16.xpose.msra.mxu0 %v582
  %755 = vmatprep.subr.bf16.mxu0 0
  %756 = vmatpush1.bf16.xpose.msra.mxu0 %v585
  %757 = vmatprep.subr.bf16.mxu0 0
  %758 = vmatpush1.bf16.xpose.msra.mxu0 %v588
  %759 = vmatprep.subr.bf16.mxu0 0
  %760 = vmatpush1.bf16.xpose.msra.mxu0 %v591
  %761 = vmatprep.subr.bf16.mxu0 0
  %762 = vmatpush1.bf16.xpose.msra.mxu0 %v594
  %763 = vmatprep.subr.bf16.mxu0 0
  %764 = vmatpush1.bf16.xpose.msra.mxu0 %v597
  %765 = vmatprep.subr.bf16.mxu0 0
  %766 = vmatpush1.bf16.xpose.msra.mxu0 %v600
  %767 = vmatprep.subr.bf16.mxu0 0
  %768 = vmatpush1.bf16.xpose.msra.mxu0 %v603
  %769 = vmatprep.subr.bf16.mxu0 0
  %770 = vmatpush1.bf16.xpose.msra.mxu0 %v606
  %771 = vmatprep.subr.bf16.mxu0 0
  %772 = vmatpush1.bf16.xpose.msra.mxu0 %v609
  %773 = vmatprep.mubr.bf16.mxu0 0
  %774 = vmatmul.mubr.bf16.gmra.mrb[0].mxu0 %v465
  %v775 = vpop.f32.mrb[0].mxu0
  %v776 = vadd.f32 0.0, %v775
  %v777 = vpop.f32.mrb[0].mxu0
  %v778 = vadd.f32 0.0, %v777
  %v779 = vpop.f32.mrb[0].mxu0
  %v780 = vpop.f32.mrb[0].mxu0
  %781 = vdwg.mxu0
  %782 = vmatprep.subr.bf16.mxu0 0
  %783 = vmatpush1.bf16.xpose.msra.mxu0 %v612
  %784 = vmatprep.subr.bf16.mxu0 0
  %785 = vmatpush1.bf16.xpose.msra.mxu0 %v615
  %786 = vmatprep.subr.bf16.mxu0 0
  %787 = vmatpush1.bf16.xpose.msra.mxu0 %v618
  %788 = vmatprep.subr.bf16.mxu0 0
  %789 = vmatpush1.bf16.xpose.msra.mxu0 %v621
  %790 = vmatprep.subr.bf16.mxu0 0
  %791 = vmatpush1.bf16.xpose.msra.mxu0 %v624
  %792 = vmatprep.subr.bf16.mxu0 0
  %793 = vmatpush1.bf16.xpose.msra.mxu0 %v627
  %794 = vmatprep.subr.bf16.mxu0 0
  %795 = vmatpush1.bf16.xpose.msra.mxu0 %v630
  %796 = vmatprep.subr.bf16.mxu0 0
  %797 = vmatpush1.bf16.xpose.msra.mxu0 %v633
  %798 = vmatprep.subr.bf16.mxu0 0
  %799 = vmatpush1.bf16.xpose.msra.mxu0 %v636
  %800 = vmatprep.subr.bf16.mxu0 0
  %801 = vmatpush1.bf16.xpose.msra.mxu0 %v639
  %802 = vmatprep.subr.bf16.mxu0 0
  %803 = vmatpush1.bf16.xpose.msra.mxu0 %v642
  %804 = vmatprep.subr.bf16.mxu0 0
  %805 = vmatpush1.bf16.xpose.msra.mxu0 %v645
  %806 = vmatprep.subr.bf16.mxu0 0
  %807 = vmatpush1.bf16.xpose.msra.mxu0 %v648
  %808 = vmatprep.subr.bf16.mxu0 0
  %809 = vmatpush1.bf16.xpose.msra.mxu0 %v651
  %810 = vmatprep.subr.bf16.mxu0 0
  %811 = vmatpush1.bf16.xpose.msra.mxu0 %v654
  %812 = vmatprep.subr.bf16.mxu0 0
  %813 = vmatpush1.bf16.xpose.msra.mxu0 %v657
  %814 = vmatprep.mubr.bf16.mxu0 0
  %815 = vmatmul.mubr.bf16.gmra.mrb[0].mxu0 %v465
  %v816 = vpop.f32.mrb[0].mxu0
  %v817 = vadd.f32 0.0, %v816
  %v818 = vpop.f32.mrb[0].mxu0
  %v819 = vadd.f32 0.0, %v818
  %v820 = vpop.f32.mrb[0].mxu0
  %v821 = vpop.f32.mrb[0].mxu0
  %822 = vdwg.mxu0
  %v823 = vmax.f32 %v694, %v696
  %v824 = vmax.f32 %v823, %v735
  %v825 = vmax.f32 %v824, %v737
  %v826 = vmax.f32 %v825, %v776
  %v827 = vmax.f32 %v826, %v778
  %v828 = vmax.f32 %v827, %v817
  %v829 = vmax.f32 %v828, %v819
  %830 = vst [vmem:[%s2] sm:$0xff] %v829
  %s831 = smul.u32 0, 128
  %v832 = vlaneseq
  %v833 = vand.u32 %v832, 127
  %v834 = vstv %s831
  %v835 = vadd.s32 %v833, %v834
  %vm836 = vcmp.lt.s32.totalorder %v835, 128
  %v837 = vsel %vm836, 1, 0
  %v838 = vcvt.s32.f32 %v837
  %839 = vadd.xlane.f32.xlu0 %v838
  %v840 = vpop.xlane.xlu0 %839
  %v841 = vmax.f32 %v840, 1.0
  %v842 = vmul.f32 %v829, %v838
  %843 = vadd.xlane.f32.xlu0 %v842
  %v844 = vpop.xlane.xlu0 %843
  %v845 = vrcp.pop %v841
  %v846 = vmul.f32 %v844, %v845
  %v847 = vsub.f32 %v829, %v846
  %v848 = vmul.f32 %v847, %v838
  %v849 = vmul.f32 %v848, %v848
  %850 = vadd.xlane.f32.xlu0 %v849
  %v851 = vpop.xlane.xlu0 %850
  %vm852 = vcmask 7168
  %v853 = vsel %vm852, %v844, %v851
  %vm854 = vcmask 15360
  %855 = vst.msk [vmem:[%s3] sm:$0xff] %vm854, %v853
  // Predicated region
  $region10: #{conv_layer_forward.2} parent=0 // pred_check
    _
  $region11: #{conv_layer_forward.2} parent=0 // pred_check_branch
    %857 = sbr.rel (0) target = $region13
  $region12: #{conv_layer_forward.2} parent=0 // pred_region
    _
  $region13: #{conv_layer_forward.2} parent=0 // pred_fallthru
    _
  // Predicated region
  $region14: #{conv_layer_forward.2} parent=0 // pred_check
    _
  $region15: #{conv_layer_forward.2} parent=0 // pred_check_branch
    %859 = sbr.rel (0) target = $region17
  $region16: #{conv_layer_forward.2} parent=0 // pred_region
    _
  $region17: #{conv_layer_forward.2} parent=0 // pred_fallthru
    _
  // Predicated region
  $region18: #{conv_layer_forward.2} parent=0 // pred_check
    _
  $region19: #{conv_layer_forward.2} parent=0 // pred_check_branch
    %861 = sbr.rel (0) target = $region21
  $region20: #{conv_layer_forward.2} parent=0 // pred_region
    _
  $region21: #{conv_layer_forward.2} parent=0 // pred_fallthru
    _
  // Predicated region
  $region22: #{conv_layer_forward.2} parent=0 // pred_check
    _
  $region23: #{conv_layer_forward.2} parent=0 // pred_check_branch
    %863 = sbr.rel (0) target = $region25
  $region24: #{conv_layer_forward.2} parent=0 // pred_region
    _
  $region25: #{conv_layer_forward.2} parent=0 // pred_fallthru
    _

// kernel: conv_layer_forward.3
$region0: #{conv_layer_forward.3}
  #allocation0 [shape = 'u32[]', space=smem, size = 0x4, offset = 0x4, fixed_abs, tag = 'smem constant byte address 0x4 - core index']
  #allocation1 [shape = 'u32[144,128]{1,0:T(1,128)}', space=vmem, size = 0x12000, scoped, tag = 'internal scratch']
  %s0 = inlined_call_operand.vmem [shape: f32[8,128], index: 0, kind: input, shape index: {}]
  %s1 = inlined_call_operand.vmem [shape: f32[8,1], index: 1, kind: input, shape index: {}]
  %s2 = inlined_call_operand.vmem [shape: f32[8,1], index: 2, kind: input, shape index: {}]
  %s3 = inlined_call_operand.vmem [shape: f32[8,128], index: 3, kind: output, shape index: {}]
  %s4 = sld [smem:[#allocation0]]
  $region22: #{conv_layer_forward.3} parent=0
    _
  %s6 = ssub.s32 1, %s4
  %s7 = scalar_select 0, %s6, %s4
  // Predicated region
  $region2: #{conv_layer_forward.3} parent=0 // pred_check
    _
  $region3: #{conv_layer_forward.3} parent=0 // pred_check_branch
    %9 = sbr.rel (0) target = $region5
  $region4: #{conv_layer_forward.3} parent=0 // pred_region
    _
  $region5: #{conv_layer_forward.3} parent=0 // pred_fallthru
    _
  // Predicated region
  $region6: #{conv_layer_forward.3} parent=0 // pred_check
    _
  $region7: #{conv_layer_forward.3} parent=0 // pred_check_branch
    %11 = sbr.rel (0) target = $region9
  $region8: #{conv_layer_forward.3} parent=0 // pred_region
    _
  $region9: #{conv_layer_forward.3} parent=0 // pred_fallthru
    _
  // Predicated region
  $region10: #{conv_layer_forward.3} parent=0 // pred_check
    _
  $region11: #{conv_layer_forward.3} parent=0 // pred_check_branch
    %13 = sbr.rel (0) target = $region13
  $region12: #{conv_layer_forward.3} parent=0 // pred_region
    _
  $region13: #{conv_layer_forward.3} parent=0 // pred_fallthru
    _
  %v14 = vld [vmem:[%s0] sm:$0xff]
  %v15 = vld [vmem:[%s1] sm:$0xff]
  %17 = vset.pattern.permute.xlu0 0
  %18 = vperm.xlu0 %17, %v15
  %v19 = vpop.permute.xlu0 %18
  %v21 = vmul.f32 %v14, %v19
  %v22 = vld [vmem:[%s2] sm:$0xff]
  %24 = vset.pattern.permute.xlu0 0
  %25 = vperm.xlu0 %24, %v22
  %v26 = vpop.permute.xlu0 %25
  %v28 = vadd.f32 %v21, %v26
  %vm29 = vcmp.gt.f32.partialorder %v28, 0.0
  %v30 = vmul.f32 %v28, 0.01
  %v31 = vsel %vm29, %v28, %v30
  %32 = vst [vmem:[%s3] sm:$0xff] %v31
  // Predicated region
  $region14: #{conv_layer_forward.3} parent=0 // pred_check
    _
  $region15: #{conv_layer_forward.3} parent=0 // pred_check_branch
    %34 = sbr.rel (0) target = $region17
  $region16: #{conv_layer_forward.3} parent=0 // pred_region
    _
  $region17: #{conv_layer_forward.3} parent=0 // pred_fallthru
    _
  // Predicated region
  $region18: #{conv_layer_forward.3} parent=0 // pred_check
    _
  $region19: #{conv_layer_forward.3} parent=0 // pred_check_branch
    %36 = sbr.rel (0) target = $region21
  $region20: #{conv_layer_forward.3} parent=0 // pred_region
    _
  $region21: #{conv_layer_forward.3} parent=0 // pred_fallthru
    _

</llo_original>
